<compile_context>
chip_gen: v7x
topology: tpu7x:2x2x1
jax: 0.10.0
libtpu: 0.0.40
codegen_flags: <defaults>
</compile_context>

<pallas_src>
import functools

import jax
import jax.numpy as jnp
from jax.experimental import pallas as pl
from jax.experimental.pallas import tpu as pltpu

_LANES = 128
_SUBLANES = 8


def _cdiv(a, b):
    return -(-a // b)


def _round_up(a, b):
    return _cdiv(a, b) * b


# ----------------------------------------------------------------------------
# Kernel: masked/renormalized BCE (streaming reduction) + fused KLD
# ----------------------------------------------------------------------------
def _loss_kernel(x_ref, r_ref, em_ref, ones_ref, mu_ref, lv_ref,
                 out_ref, acc_ref):
    c = pl.program_id(0)                  # parallel (megacore) axis
    i = pl.program_id(1)                  # streaming reduction axis
    n_i = pl.num_programs(1)

    @pl.when(i == 0)
    def _init():
        acc_ref[...] = jnp.zeros_like(acc_ref)

    x = x_ref[...].astype(jnp.float32)    # (TM, 128): 128/R one-hot rows per vreg row
    r = r_ref[...].astype(jnp.float32)    # (TM, 128): predicted probabilities

    # mask gather as block-diagonal MXU matmul (exact: operands are 0/1 in bf16).
    mask = jnp.dot(x.astype(jnp.bfloat16), em_ref[...],
                   preferred_element_type=jnp.float32)

    x_resc = r * mask
    # Segmented per-logical-row sum, broadcast back over each R-lane segment,
    # via a block-diagonal ones matmul (HIGHEST precision ~ f32 accumulation).
    scaler = jnp.dot(x_resc, ones_ref[...],
                     precision=jax.lax.Precision.HIGHEST,
                     preferred_element_type=jnp.float32)
    # Guard: padded (all-zero) rows have scaler == 0 and must contribute 0.
    safe = jnp.where(scaler > 0.0, scaler, 1.0)
    out = x_resc / safe

    # PyTorch BCELoss clamps log at -100 (clamp before multiply avoids 0*inf).
    log_p = jnp.maximum(jnp.log(out), -100.0)
    log_1mp = jnp.maximum(jnp.log(1.0 - out), -100.0)
    contrib = -(x * log_p + (1.0 - x) * log_1mp)          # (TM, 128)

    # Per-(sublane, lane) partial sums -> pure VPU adds, no per-step XLU reduce.
    tm = contrib.shape[0]
    acc_ref[...] += jnp.sum(
        contrib.reshape(tm // _SUBLANES, _SUBLANES, _LANES), axis=0)

    # Fuse KLD on core 0's last step (tiny (B, L) tensors, no extra dispatch).
    @pl.when((i == n_i - 1) & (c == 0))
    def _kld():
        mu = mu_ref[...].astype(jnp.float32)
        lv = lv_ref[...].astype(jnp.float32)
        kld = -0.5 * jnp.sum(1.0 + lv - mu * mu - jnp.exp(lv))
        ii = jax.lax.broadcasted_iota(jnp.int32, (_SUBLANES, _LANES), 0)
        jj = jax.lax.broadcasted_iota(jnp.int32, (_SUBLANES, _LANES), 1)
        acc_ref[...] += jnp.where((ii == 0) & (jj == 0), kld, 0.0)

    @pl.when(i == n_i - 1)
    def _flush():
        out_ref[0] = acc_ref[...]


# ----------------------------------------------------------------------------
# Wrapper
# ----------------------------------------------------------------------------
@functools.partial(jax.jit, static_argnames=("tile_rows", "n_split"))
def vae_loss(x, mu, log_var, recon_x, expanded_masks, *,
             tile_rows=2048, n_split=2):
    """VAELoss.forward.  x/recon_x: (B, S, R); mu/log_var: (B, L).

    expanded_masks[r, :] = masks[ind_to_lhs_ind[r], :]  (precomputed once).
    """
    B, S, R = x.shape
    if R > _LANES:
        # TODO(synk): rule axes wider than 128 lanes would need a second lane tile.
        raise NotImplementedError("n_rules > 128 not supported")

    # Pad rule axis up to a power of two (divides 128) so whole logical rows
    # pack into lane segments.  Zero-padded rules contribute exactly 0.
    r_pad = 1
    while r_pad < R:
        r_pad *= 2
    pack = _LANES // r_pad                    # logical rows per 128-lane row

    n = B * S
    x_flat = x.reshape(n, R)                  # keep original dtype (no HBM-doubling cast)
    rec_flat = recon_x.reshape(n, R)
    if r_pad != R:
        x_flat = jnp.pad(x_flat, ((0, 0), (0, r_pad - R)))
        rec_flat = jnp.pad(rec_flat, ((0, 0), (0, r_pad - R)))
        expanded_masks = jnp.pad(expanded_masks,
                                 ((0, r_pad - R), (0, r_pad - R)))

    # Tile / grid sizing with remainder padding (zero rows contribute 0).
    n_packed = _cdiv(n, pack)
    tile = min(tile_rows, _round_up(_cdiv(n_packed, n_split), _SUBLANES))
    n_inner = _cdiv(n_packed, n_split * tile)
    n_packed_pad = n_split * n_inner * tile
    n_pad = n_packed_pad * pack
    if n_pad != n:
        x_flat = jnp.pad(x_flat, ((0, n_pad - n), (0, 0)))
        rec_flat = jnp.pad(rec_flat, ((0, n_pad - n), (0, 0)))

    x_packed = x_flat.reshape(n_packed_pad, _LANES)
    rec_packed = rec_flat.reshape(n_packed_pad, _LANES)

    # Block-diagonal matrices: mask gather + segmented row-sum, both on the MXU.
    em_bd = jnp.kron(jnp.eye(pack, dtype=jnp.float32),
                     expanded_masks.astype(jnp.float32)).astype(jnp.bfloat16)
    ones_bd = jnp.kron(jnp.eye(pack, dtype=jnp.float32),
                       jnp.ones((r_pad, r_pad), jnp.float32))

    Bm, L = mu.shape

    partials = pl.pallas_call(
        _loss_kernel,
        out_shape=jax.ShapeDtypeStruct((n_split, _SUBLANES, _LANES), jnp.float32),
        grid_spec=pltpu.PrefetchScalarGridSpec(
            num_scalar_prefetch=0,
            grid=(n_split, n_inner),
            in_specs=[
                pl.BlockSpec((tile, _LANES), lambda c, i: (c * n_inner + i, 0)),
                pl.BlockSpec((tile, _LANES), lambda c, i: (c * n_inner + i, 0)),
                pl.BlockSpec((_LANES, _LANES), lambda c, i: (0, 0)),
                pl.BlockSpec((_LANES, _LANES), lambda c, i: (0, 0)),
                pl.BlockSpec((Bm, L), lambda c, i: (0, 0)),
                pl.BlockSpec((Bm, L), lambda c, i: (0, 0)),
            ],
            out_specs=pl.BlockSpec((1, _SUBLANES, _LANES),
                                   lambda c, i: (c, 0, 0)),
            scratch_shapes=[pltpu.VMEM((_SUBLANES, _LANES), jnp.float32)],
        ),
        compiler_params=pltpu.CompilerParams(
            dimension_semantics=("parallel", "arbitrary")),
    )(x_packed, rec_packed, em_bd, ones_bd, mu, log_var)

    # partials already contain BCE (both cores) + KLD (core 0).
    return jnp.sum(partials) / jnp.float32(B)


# ----------------------------------------------------------------------------
# Reference (plain JAX) for validation
# ----------------------------------------------------------------------------
def vae_loss_ref(x, mu, log_var, recon_x, expanded_masks):
    B = x.shape[0]
    true_ind = jnp.argmax(x, axis=-1)                 # (B, S)
    mask = expanded_masks[true_ind]                   # (B, S, R)
    x_resc = recon_x * mask
    out = x_resc / jnp.sum(x_resc, axis=-1, keepdims=True)
    log_p = jnp.maximum(jnp.log(out), -100.0)
    log_1mp = jnp.maximum(jnp.log(1.0 - out), -100.0)
    bce = -jnp.sum(x * log_p + (1.0 - x) * log_1mp)
    kld = -0.5 * jnp.sum(1.0 + log_var - mu ** 2 - jnp.exp(log_var))
    return (bce + kld) / B


# ----------------------------------------------------------------------------
# Main
# ----------------------------------------------------------------------------
if __name__ == "__main__":
    # Small synthetic "grammar": R production rules, N_LHS left-hand symbols.
    B, S = 2, 8          # batch, sequence length
    R = 16               # number of grammar rules (element axis)
    L = 8                # latent dim for mu / log_var
    N_LHS = 4            # number of distinct LHS symbols

    # Deterministic grammar parameters (module __init__ equivalents).
    ind_to_lhs_ind = jnp.arange(R, dtype=jnp.int32) % N_LHS            # (R,)
    lhs_ids = jnp.arange(N_LHS)[:, None]
    masks = (jnp.arange(R)[None, :] % N_LHS == lhs_ids).astype(jnp.float32)  # (N_LHS, R)
    # Per-rule mask rows so the in-kernel gather becomes a matmul.
    expanded_masks = masks[ind_to_lhs_ind]                             # (R, R)

    key = jax.random.PRNGKey(0)
    k1, k2, k3, k4 = jax.random.split(key, 4)

    true_rules = jax.random.randint(k1, (B, S), 0, R)
    x = jax.nn.one_hot(true_rules, R, dtype=jnp.float32)               # (B, S, R)
    recon_x = jax.nn.softmax(jax.random.normal(k2, (B, S, R)), axis=-1)
    mu = jax.random.normal(k3, (B, L), dtype=jnp.float32)
    log_var = 0.1 * jax.random.normal(k4, (B, L), dtype=jnp.float32)

    loss = vae_loss(x, mu, log_var, recon_x, expanded_masks)
    loss = jax.block_until_ready(loss)

    ref = vae_loss_ref(x, mu, log_var, recon_x, expanded_masks)
    assert jnp.allclose(loss, ref, rtol=1e-4, atol=1e-4), (loss, ref)

    print("KERNEL_OK")
</pallas_src>

<mosaic_0001>
module attributes {stable_mosaic.version = 11 : i64} {
  func.func @_loss_kernel(%arg0: i32, %arg1: i32, %arg2: memref<8x128xf32, #tpu.memory_space<vmem>>, %arg3: memref<8x128xf32, #tpu.memory_space<vmem>>, %arg4: memref<128x128xbf16, #tpu.memory_space<vmem>>, %arg5: memref<128x128xf32, #tpu.memory_space<vmem>>, %arg6: memref<2x8xf32, #tpu.memory_space<vmem>>, %arg7: memref<2x8xf32, #tpu.memory_space<vmem>>, %arg8: memref<1x8x128xf32, #tpu.memory_space<vmem>>, %arg9: memref<8x128xf32, #tpu.memory_space<vmem>>) attributes {dimension_semantics = [#tpu.dimension_semantics<parallel>, #tpu.dimension_semantics<arbitrary>], iteration_bounds = array<i64: 2, 1>, scalar_prefetch = 0 : i64, scratch_operands = 1 : i64, tpu.core_type = #tpu.core_type<tc>, window_params = [{transform_indices = @transform_0, window_bounds = array<i64: 8, 128>}, {transform_indices = @transform_1, window_bounds = array<i64: 8, 128>}, {pipeline_mode = #tpu.pipeline_mode<synchronous>, transform_indices = @transform_2, window_bounds = array<i64: 128, 128>}, {pipeline_mode = #tpu.pipeline_mode<synchronous>, transform_indices = @transform_3, window_bounds = array<i64: 128, 128>}, {pipeline_mode = #tpu.pipeline_mode<synchronous>, transform_indices = @transform_4, window_bounds = array<i64: 2, 8>}, {pipeline_mode = #tpu.pipeline_mode<synchronous>, transform_indices = @transform_5, window_bounds = array<i64: 2, 8>}, {transform_indices = @transform_6, window_bounds = array<i64: 1, 8, 128>}]} {
    %c0_i32 = arith.constant 0 : i32
    %0 = arith.cmpi eq, %arg1, %c0_i32 : i32
    %1 = arith.extui %0 : i1 to i32
    %c0_i32_0 = arith.constant 0 : i32
    %2 = arith.cmpi ne, %1, %c0_i32_0 : i32
    scf.if %2 {
      %cst_26 = arith.constant 0.000000e+00 : f32
      %44 = vector.broadcast %cst_26 : f32 to vector<8x128xf32>
      %c0_27 = arith.constant 0 : index
      %c0_28 = arith.constant 0 : index
      %45 = vector.load %arg9[%c0_27, %c0_28] : memref<8x128xf32, #tpu.memory_space<vmem>>, vector<8x128xf32>
      tpu.vector_store %arg9[%c0_27, %c0_28], %44 {strides = array<i32>} : memref<8x128xf32, #tpu.memory_space<vmem>>, vector<8x128xf32>,
    } else {
    }
    %c0 = arith.constant 0 : index
    %c0_1 = arith.constant 0 : index
    %3 = vector.load %arg2[%c0, %c0_1] : memref<8x128xf32, #tpu.memory_space<vmem>>, vector<8x128xf32>
    %c0_2 = arith.constant 0 : index
    %c0_3 = arith.constant 0 : index
    %4 = vector.load %arg3[%c0_2, %c0_3] : memref<8x128xf32, #tpu.memory_space<vmem>>, vector<8x128xf32>
    %5 = arith.truncf %3 : vector<8x128xf32> to vector<8x128xbf16>
    %c0_4 = arith.constant 0 : index
    %c0_5 = arith.constant 0 : index
    %6 = vector.load %arg4[%c0_4, %c0_5] : memref<128x128xbf16, #tpu.memory_space<vmem>>, vector<128x128xbf16>
    %cst = arith.constant dense<0.000000e+00> : vector<8x128xf32>
    %7 = tpu.matmul %5, %6, %cst {dimension_numbers = #tpu.dot_dimension_numbers<[1], [0], [0], [1], [0, 0, 1, 1], [], []>} : vector<8x128xbf16>, vector<128x128xbf16>, vector<8x128xf32> -> vector<8x128xf32>
    %8 = arith.mulf %4, %7 : vector<8x128xf32>
    %c0_6 = arith.constant 0 : index
    %c0_7 = arith.constant 0 : index
    %9 = vector.load %arg5[%c0_6, %c0_7] : memref<128x128xf32, #tpu.memory_space<vmem>>, vector<128x128xf32>
    %cst_8 = arith.constant dense<0.000000e+00> : vector<8x128xf32>
    %10 = tpu.matmul %8, %9, %cst_8 {dimension_numbers = #tpu.dot_dimension_numbers<[1], [0], [0], [1], [0, 0, 1, 1], [], []>, precision = #tpu.contract_precision<fp32>} : vector<8x128xf32>, vector<128x128xf32>, vector<8x128xf32> -> vector<8x128xf32>
    %cst_9 = arith.constant 0.000000e+00 : f32
    %11 = vector.broadcast %cst_9 : f32 to vector<8x128xf32>
    %12 = arith.cmpf ogt, %10, %11 : vector<8x128xf32>
    %cst_10 = arith.constant 1.000000e+00 : f32
    %13 = vector.broadcast %cst_10 : f32 to vector<8x128xf32>
    %14 = arith.select %12, %10, %13 : vector<8x128xi1>, vector<8x128xf32>
    %15 = arith.divf %8, %14 : vector<8x128xf32>
    %16 = math.log %15 : vector<8x128xf32>
    %cst_11 = arith.constant -1.000000e+02 : f32
    %17 = vector.broadcast %cst_11 : f32 to vector<8x128xf32>
    %18 = arith.maximumf %16, %17 : vector<8x128xf32>
    %cst_12 = arith.constant 1.000000e+00 : f32
    %19 = vector.broadcast %cst_12 : f32 to vector<8x128xf32>
    %20 = arith.subf %19, %15 : vector<8x128xf32>
    %21 = math.log %20 : vector<8x128xf32>
    %cst_13 = arith.constant -1.000000e+02 : f32
    %22 = vector.broadcast %cst_13 : f32 to vector<8x128xf32>
    %23 = arith.maximumf %21, %22 : vector<8x128xf32>
    %24 = arith.mulf %3, %18 : vector<8x128xf32>
    %cst_14 = arith.constant 1.000000e+00 : f32
    %25 = vector.broadcast %cst_14 : f32 to vector<8x128xf32>
    %26 = arith.subf %25, %3 : vector<8x128xf32>
    %27 = arith.mulf %26, %23 : vector<8x128xf32>
    %28 = arith.addf %24, %27 : vector<8x128xf32>
    %cst_15 = arith.constant 0.000000e+00 : f32
    %29 = vector.broadcast %cst_15 : f32 to vector<8x128xf32>
    %30 = arith.subf %29, %28 : vector<8x128xf32>
    %c0_16 = arith.constant 0 : index
    %c0_17 = arith.constant 0 : index
    %31 = vector.load %arg9[%c0_16, %c0_17] : memref<8x128xf32, #tpu.memory_space<vmem>>, vector<8x128xf32>
    %32 = vector.shape_cast %30 : vector<8x128xf32> to vector<1x8x128xf32>
    %cst_18 = arith.constant dense<0.000000e+00> : vector<8x128xf32>
    %33 = vector.multi_reduction <add>, %32, %cst_18 [0] : vector<1x8x128xf32> to vector<8x128xf32>
    %34 = arith.addf %31, %33 : vector<8x128xf32>
    %c0_19 = arith.constant 0 : index
    %c0_20 = arith.constant 0 : index
    %35 = vector.load %arg9[%c0_19, %c0_20] : memref<8x128xf32, #tpu.memory_space<vmem>>, vector<8x128xf32>
    tpu.vector_store %arg9[%c0_19, %c0_20], %34 {strides = array<i32>} : memref<8x128xf32, #tpu.memory_space<vmem>>, vector<8x128xf32>,
    %c0_i32_21 = arith.constant 0 : i32
    %36 = arith.cmpi eq, %arg1, %c0_i32_21 : i32
    %c0_i32_22 = arith.constant 0 : i32
    %37 = arith.cmpi eq, %arg0, %c0_i32_22 : i32
    %38 = arith.andi %36, %37 : i1
    %39 = arith.extui %38 : i1 to i32
    %c0_i32_23 = arith.constant 0 : i32
    %40 = arith.cmpi ne, %39, %c0_i32_23 : i32
    scf.if %40 {
      %c0_26 = arith.constant 0 : index
      %c0_27 = arith.constant 0 : index
      %44 = vector.load %arg6[%c0_26, %c0_27] : memref<2x8xf32, #tpu.memory_space<vmem>>, vector<2x8xf32>
      %c0_28 = arith.constant 0 : index
      %c0_29 = arith.constant 0 : index
      %45 = vector.load %arg7[%c0_28, %c0_29] : memref<2x8xf32, #tpu.memory_space<vmem>>, vector<2x8xf32>
      %cst_30 = arith.constant 1.000000e+00 : f32
      %46 = vector.broadcast %cst_30 : f32 to vector<2x8xf32>
      %47 = arith.addf %46, %45 : vector<2x8xf32>
      %48 = arith.mulf %44, %44 : vector<2x8xf32>
      %49 = arith.subf %47, %48 : vector<2x8xf32>
      %50 = math.exp %45 : vector<2x8xf32>
      %51 = arith.subf %49, %50 : vector<2x8xf32>
      %52 = vector.shape_cast %51 : vector<2x8xf32> to vector<1x2x8xf32>
      %cst_31 = arith.constant dense<0.000000e+00> : vector<1xf32>
      %53 = vector.multi_reduction <add>, %52, %cst_31 [1, 2] : vector<1x2x8xf32> to vector<1xf32>
      %54 = vector.shape_cast %53 : vector<1xf32> to vector<1x1x1xf32>
      %55 = vector.extract %54[0, 0, 0] : f32 from vector<1x1x1xf32>
      %cst_32 = arith.constant -5.000000e-01 : f32
      %56 = arith.mulf %cst_32, %55 : f32
      %57 = tpu.iota {dimensions = array<i32: 0>} : vector<8x128xi32>
      %58 = tpu.iota {dimensions = array<i32: 1>} : vector<8x128xi32>
      %c0_33 = arith.constant 0 : index
      %c0_34 = arith.constant 0 : index
      %59 = vector.load %arg9[%c0_33, %c0_34] : memref<8x128xf32, #tpu.memory_space<vmem>>, vector<8x128xf32>
      %c0_i32_35 = arith.constant 0 : i32
      %60 = vector.broadcast %c0_i32_35 : i32 to vector<8x128xi32>
      %61 = arith.cmpi eq, %57, %60 : vector<8x128xi32>
      %c0_i32_36 = arith.constant 0 : i32
      %62 = vector.broadcast %c0_i32_36 : i32 to vector<8x128xi32>
      %63 = arith.cmpi eq, %58, %62 : vector<8x128xi32>
      %64 = arith.andi %61, %63 : vector<8x128xi1>
      %cst_37 = arith.constant 0.000000e+00 : f32
      %65 = vector.broadcast %56 : f32 to vector<8x128xf32>
      %66 = vector.broadcast %cst_37 : f32 to vector<8x128xf32>
      %67 = arith.select %64, %65, %66 : vector<8x128xi1>, vector<8x128xf32>
      %68 = arith.addf %59, %67 : vector<8x128xf32>
      %c0_38 = arith.constant 0 : index
      %c0_39 = arith.constant 0 : index
      %69 = vector.load %arg9[%c0_38, %c0_39] : memref<8x128xf32, #tpu.memory_space<vmem>>, vector<8x128xf32>
      tpu.vector_store %arg9[%c0_38, %c0_39], %68 {strides = array<i32>} : memref<8x128xf32, #tpu.memory_space<vmem>>, vector<8x128xf32>,
    } else {
    }
    %c0_i32_24 = arith.constant 0 : i32
    %41 = arith.cmpi eq, %arg1, %c0_i32_24 : i32
    %42 = arith.extui %41 : i1 to i32
    %c0_i32_25 = arith.constant 0 : i32
    %43 = arith.cmpi ne, %42, %c0_i32_25 : i32
    scf.if %43 {
      %c0_26 = arith.constant 0 : index
      %c0_27 = arith.constant 0 : index
      %44 = vector.load %arg9[%c0_26, %c0_27] : memref<8x128xf32, #tpu.memory_space<vmem>>, vector<8x128xf32>
      %c0_28 = arith.constant 0 : index
      %c0_29 = arith.constant 0 : index
      %c0_30 = arith.constant 0 : index
      %45 = vector.load %arg8[%c0_28, %c0_29, %c0_30] : memref<1x8x128xf32, #tpu.memory_space<vmem>>, vector<1x8x128xf32>
      %46 = vector.shape_cast %45 : vector<1x8x128xf32> to vector<8x128xf32>
      %47 = vector.shape_cast %44 : vector<8x128xf32> to vector<1x8x128xf32>
      tpu.vector_store %arg8[%c0_28, %c0_29, %c0_30], %47 {strides = array<i32>} : memref<1x8x128xf32, #tpu.memory_space<vmem>>, vector<1x8x128xf32>,
    } else {
    }
    return
  }
  func.func @transform_0(%arg0: i32, %arg1: i32) -> (i32, i32) {
    %c1_i32 = arith.constant 1 : i32
    %0 = arith.muli %arg0, %c1_i32 : i32
    %1 = arith.addi %0, %arg1 : i32
    %c0_i32 = arith.constant 0 : i32
    %c0_i32_0 = arith.constant 0 : i32
    return %1, %c0_i32 : i32, i32
  }
  func.func @transform_1(%arg0: i32, %arg1: i32) -> (i32, i32) {
    %c1_i32 = arith.constant 1 : i32
    %0 = arith.muli %arg0, %c1_i32 : i32
    %1 = arith.addi %0, %arg1 : i32
    %c0_i32 = arith.constant 0 : i32
    %c0_i32_0 = arith.constant 0 : i32
    return %1, %c0_i32 : i32, i32
  }
  func.func @transform_2(%arg0: i32, %arg1: i32) -> (i32, i32) {
    %c0_i32 = arith.constant 0 : i32
    %c0_i32_0 = arith.constant 0 : i32
    %c0_i32_1 = arith.constant 0 : i32
    return %c0_i32, %c0_i32_0 : i32, i32
  }
  func.func @transform_3(%arg0: i32, %arg1: i32) -> (i32, i32) {
    %c0_i32 = arith.constant 0 : i32
    %c0_i32_0 = arith.constant 0 : i32
    %c0_i32_1 = arith.constant 0 : i32
    return %c0_i32, %c0_i32_0 : i32, i32
  }
  func.func @transform_4(%arg0: i32, %arg1: i32) -> (i32, i32) {
    %c0_i32 = arith.constant 0 : i32
    %c0_i32_0 = arith.constant 0 : i32
    %c0_i32_1 = arith.constant 0 : i32
    return %c0_i32, %c0_i32_0 : i32, i32
  }
  func.func @transform_5(%arg0: i32, %arg1: i32) -> (i32, i32) {
    %c0_i32 = arith.constant 0 : i32
    %c0_i32_0 = arith.constant 0 : i32
    %c0_i32_1 = arith.constant 0 : i32
    return %c0_i32, %c0_i32_0 : i32, i32
  }
  func.func @transform_6(%arg0: i32, %arg1: i32) -> (i32, i32, i32) {
    %c0_i32 = arith.constant 0 : i32
    %c0_i32_0 = arith.constant 0 : i32
    %c0_i32_1 = arith.constant 0 : i32
    return %arg0, %c0_i32, %c0_i32_0 : i32, i32, i32
  }
}

</mosaic_0001>

<llo_original>
// kernel: vae_loss.1
$region0: #{vae_loss.1}
  #allocation0 [shape = 'u32[]', space=smem, size = 0x4, offset = 0x4, fixed_abs, tag = 'smem constant byte address 0x4 - core index']
  #allocation1 [shape = 'u32[144,128]{1,0:T(1,128)}', space=vmem, size = 0x12000, scoped, tag = 'internal scratch']
  #allocation2 [shape = 'f32[8,128]{1,0:T(8,128)}', space=vmem, size = 0x1000, scoped, tag = 'scratch operand']
  %s0 = inlined_call_operand.vmem [shape: f32[16,128], index: 0, kind: input, shape index: {}]
  %s1 = inlined_call_operand.vmem [shape: f32[16,128], index: 1, kind: input, shape index: {}]
  %s2 = inlined_call_operand.vmem [shape: bf16[128,128], index: 2, kind: input, shape index: {}]
  %s3 = inlined_call_operand.vmem [shape: f32[128,128], index: 3, kind: input, shape index: {}]
  %s4 = inlined_call_operand.vmem [shape: f32[2,8], index: 4, kind: input, shape index: {}]
  %s5 = inlined_call_operand.vmem [shape: f32[2,8], index: 5, kind: input, shape index: {}]
  %s6 = inlined_call_operand.vmem [shape: f32[2,8,128], index: 6, kind: output, shape index: {}]
  %s7 = sld [smem:[#allocation0]]
  $region69: #{vae_loss.1} parent=0
    _
  %s9 = ssub.s32 1, %s7
  %s10 = scalar_select 0, %s9, %s7
  loop: start=0, step=1, limit=4
  $region2: #{vae_loss.1} parent=0 // loop_pre_header
    _
  $region3: #{vae_loss.1} parent=0 // loop_header
    %s12 = sphi 0, %s16
    %p13 = scmp.ge.s32.totalorder %s12, 4
    %s19 = sphi 0, %s31
    %s20 = sphi 0, %s27
    %s21 = sphi 0, %s19
    %s22 = sphi 0, %s20
    %s23 = sphi 0, %s21
    %s24 = sphi 0, %s22
    %s36 = sphi 0, %s38
    %s39 = sphi 0, %s36
    %s40 = sphi 0, %s39
    %s56 = sphi 0, %s40
    %s64 = sphi 0, %s66
    %s67 = sphi 0, %s64
    %s68 = sphi 0, %s67
    %s84 = sphi 0, %s68
    %s88 = sphi 0, %s88
    %s90 = sphi 0, %s88
    %s91 = sphi 0, %s90
    %s105 = sphi 0, %s91
    %s109 = sphi 0, %s109
    %s111 = sphi 0, %s109
    %s112 = sphi 0, %s111
    %s126 = sphi 0, %s112
    %s130 = sphi 0, %s130
    %s132 = sphi 0, %s130
    %s133 = sphi 0, %s132
    %s147 = sphi 0, %s133
    %s151 = sphi 0, %s151
    %s153 = sphi 0, %s151
    %s154 = sphi 0, %s153
    %s168 = sphi 0, %s154
    %s174 = sphi 0, %s176
    %s177 = sphi 0, %s174
    %s178 = sphi 0, %s177
    %s194 = sphi 0, %s178
  $region4: #{vae_loss.1} parent=0 // loop_header_branch
    %15 = sbr.rel (%p13) target = $region8
  $region5: #{vae_loss.1} parent=0 // loop_body
    %s17 = ssub.s32 %s12, 1
    %s18 = ssub.s32 %s12, 2
    %s25 = sadd.s32 1, %s20
    %p26 = scmp.ge.s32.totalorder %s25, 1
    %s27 = scalar_select %p26, 0, %s25
    %s28 = sadd.s32 1, %s19
    %s29 = scalar_select %p26, %s28, %s19
    %p30 = scmp.ge.s32.totalorder %s29, 2
    %s31 = scalar_select %p30, 0, %s29
    %s32 = sadd.s32 %s19, %s20
    %s33 = sadd.s32 %s31, %s27
    %s34 = ssub.s32 %s32, %s33
    %p35 = scmp.eq.s32.totalorder %s34, 0
    %s37 = sadd.s32 %s36, 1
    %s38 = scalar_select %p35, %s36, %s37
    %p41 = pneg %p35
    %p42 = scmp.eq.s32.totalorder %s12, 1
    %p43 = por %p41, %p42
    %p44 = scmp.ne.s32.totalorder %s36, %s39
    %p45 = scmp.eq.s32.totalorder %s12, 0
    %p46 = por %p44, %p45
    %p47 = scmp.ne.s32.totalorder %s36, %s39
    %p48 = scmp.eq.s32.totalorder %s17, 1
    %p49 = por %p47, %p48
    %p50 = scmp.ne.s32.totalorder %s39, %s40
    %p51 = scmp.eq.s32.totalorder %s17, 0
    %p52 = por %p50, %p51
    %p53 = scmp.ne.s32.totalorder %s39, %s40
    %p54 = scmp.eq.s32.totalorder %s18, 1
    %p55 = por %p53, %p54
    %p57 = scmp.ne.s32.totalorder %s40, %s56
    %p58 = scmp.eq.s32.totalorder %s18, 0
    %p59 = por %p57, %p58
    %s60 = sadd.s32 %s19, %s20
    %s61 = sadd.s32 %s31, %s27
    %s62 = ssub.s32 %s60, %s61
    %p63 = scmp.eq.s32.totalorder %s62, 0
    %s65 = sadd.s32 %s64, 1
    %s66 = scalar_select %p63, %s64, %s65
    %p69 = pneg %p63
    %p70 = scmp.eq.s32.totalorder %s12, 1
    %p71 = por %p69, %p70
    %p72 = scmp.ne.s32.totalorder %s64, %s67
    %p73 = scmp.eq.s32.totalorder %s12, 0
    %p74 = por %p72, %p73
    %p75 = scmp.ne.s32.totalorder %s64, %s67
    %p76 = scmp.eq.s32.totalorder %s17, 1
    %p77 = por %p75, %p76
    %p78 = scmp.ne.s32.totalorder %s67, %s68
    %p79 = scmp.eq.s32.totalorder %s17, 0
    %p80 = por %p78, %p79
    %p81 = scmp.ne.s32.totalorder %s67, %s68
    %p82 = scmp.eq.s32.totalorder %s18, 1
    %p83 = por %p81, %p82
    %p85 = scmp.ne.s32.totalorder %s68, %s84
    %p86 = scmp.eq.s32.totalorder %s18, 0
    %p87 = por %p85, %p86
    %s89 = sadd.s32 %s88, 1
    %p92 = scmp.eq.s32.totalorder %s12, 1
    %p93 = scmp.ne.s32.totalorder %s88, %s90
    %p94 = scmp.eq.s32.totalorder %s12, 0
    %p95 = por %p93, %p94
    %p96 = scmp.ne.s32.totalorder %s88, %s90
    %p97 = scmp.eq.s32.totalorder %s17, 1
    %p98 = por %p96, %p97
    %p99 = scmp.ne.s32.totalorder %s90, %s91
    %p100 = scmp.eq.s32.totalorder %s17, 0
    %p101 = por %p99, %p100
    %p102 = scmp.ne.s32.totalorder %s90, %s91
    %p103 = scmp.eq.s32.totalorder %s18, 1
    %p104 = por %p102, %p103
    %p106 = scmp.ne.s32.totalorder %s91, %s105
    %p107 = scmp.eq.s32.totalorder %s18, 0
    %p108 = por %p106, %p107
    %s110 = sadd.s32 %s109, 1
    %p113 = scmp.eq.s32.totalorder %s12, 1
    %p114 = scmp.ne.s32.totalorder %s109, %s111
    %p115 = scmp.eq.s32.totalorder %s12, 0
    %p116 = por %p114, %p115
    %p117 = scmp.ne.s32.totalorder %s109, %s111
    %p118 = scmp.eq.s32.totalorder %s17, 1
    %p119 = por %p117, %p118
    %p120 = scmp.ne.s32.totalorder %s111, %s112
    %p121 = scmp.eq.s32.totalorder %s17, 0
    %p122 = por %p120, %p121
    %p123 = scmp.ne.s32.totalorder %s111, %s112
    %p124 = scmp.eq.s32.totalorder %s18, 1
    %p125 = por %p123, %p124
    %p127 = scmp.ne.s32.totalorder %s112, %s126
    %p128 = scmp.eq.s32.totalorder %s18, 0
    %p129 = por %p127, %p128
    %s131 = sadd.s32 %s130, 1
    %p134 = scmp.eq.s32.totalorder %s12, 1
    %p135 = scmp.ne.s32.totalorder %s130, %s132
    %p136 = scmp.eq.s32.totalorder %s12, 0
    %p137 = por %p135, %p136
    %p138 = scmp.ne.s32.totalorder %s130, %s132
    %p139 = scmp.eq.s32.totalorder %s17, 1
    %p140 = por %p138, %p139
    %p141 = scmp.ne.s32.totalorder %s132, %s133
    %p142 = scmp.eq.s32.totalorder %s17, 0
    %p143 = por %p141, %p142
    %p144 = scmp.ne.s32.totalorder %s132, %s133
    %p145 = scmp.eq.s32.totalorder %s18, 1
    %p146 = por %p144, %p145
    %p148 = scmp.ne.s32.totalorder %s133, %s147
    %p149 = scmp.eq.s32.totalorder %s18, 0
    %p150 = por %p148, %p149
    %s152 = sadd.s32 %s151, 1
    %p155 = scmp.eq.s32.totalorder %s12, 1
    %p156 = scmp.ne.s32.totalorder %s151, %s153
    %p157 = scmp.eq.s32.totalorder %s12, 0
    %p158 = por %p156, %p157
    %p159 = scmp.ne.s32.totalorder %s151, %s153
    %p160 = scmp.eq.s32.totalorder %s17, 1
    %p161 = por %p159, %p160
    %p162 = scmp.ne.s32.totalorder %s153, %s154
    %p163 = scmp.eq.s32.totalorder %s17, 0
    %p164 = por %p162, %p163
    %p165 = scmp.ne.s32.totalorder %s153, %s154
    %p166 = scmp.eq.s32.totalorder %s18, 1
    %p167 = por %p165, %p166
    %p169 = scmp.ne.s32.totalorder %s154, %s168
    %p170 = scmp.eq.s32.totalorder %s18, 0
    %p171 = por %p169, %p170
    %s172 = ssub.s32 %s19, %s31
    %p173 = scmp.eq.s32.totalorder %s172, 0
    %s175 = sadd.s32 %s174, 1
    %s176 = scalar_select %p173, %s174, %s175
    %p179 = pneg %p173
    %p180 = scmp.eq.s32.totalorder %s12, 1
    %p181 = por %p179, %p180
    %p182 = scmp.ne.s32.totalorder %s174, %s177
    %p183 = scmp.eq.s32.totalorder %s12, 0
    %p184 = por %p182, %p183
    %p185 = scmp.ne.s32.totalorder %s174, %s177
    %p186 = scmp.eq.s32.totalorder %s17, 1
    %p187 = por %p185, %p186
    %p188 = scmp.ne.s32.totalorder %s177, %s178
    %p189 = scmp.eq.s32.totalorder %s17, 0
    %p190 = por %p188, %p189
    %p191 = scmp.ne.s32.totalorder %s177, %s178
    %p192 = scmp.eq.s32.totalorder %s18, 1
    %p193 = por %p191, %p192
    %p195 = scmp.ne.s32.totalorder %s178, %s194
    %p196 = scmp.eq.s32.totalorder %s18, 0
    %p197 = por %p195, %p196
    %p198 = scmp.le.s32.totalorder 1, %s12
    %p199 = scmp.lt.s32.totalorder %s12, 3
    %p200 = pnand %p198, %p199
    %p201 = pneg %p200
    // Predicated region
    $region9: #{vae_loss.1} parent=5 // pred_check
      _
    $region10: #{vae_loss.1} parent=5 // pred_check_branch
      %203 = sbr.rel (%p200) target = $region12
    $region11: #{vae_loss.1} parent=5 // pred_region
      %s204 = ssub.s32 %s12, 1
      // Predicated region
      $region13: #{vae_loss.1} parent=11 // pred_check
        %p205 = pneg %p101
      $region14: #{vae_loss.1} parent=11 // pred_check_branch
        %207 = sbr.rel (%p205) target = $region16
      $region15: #{vae_loss.1} parent=11 // pred_region
        _
      $region16: #{vae_loss.1} parent=11 // pred_fallthru
        _
      // Predicated region
      $region17: #{vae_loss.1} parent=11 // pred_check
        %p208 = pneg %p122
      $region18: #{vae_loss.1} parent=11 // pred_check_branch
        %210 = sbr.rel (%p208) target = $region20
      $region19: #{vae_loss.1} parent=11 // pred_region
        _
      $region20: #{vae_loss.1} parent=11 // pred_fallthru
        _
      // Predicated region
      $region21: #{vae_loss.1} parent=11 // pred_check
        %p211 = pneg %p143
      $region22: #{vae_loss.1} parent=11 // pred_check_branch
        %213 = sbr.rel (%p211) target = $region24
      $region23: #{vae_loss.1} parent=11 // pred_region
        _
      $region24: #{vae_loss.1} parent=11 // pred_fallthru
        _
      // Predicated region
      $region25: #{vae_loss.1} parent=11 // pred_check
        %p214 = pneg %p164
      $region26: #{vae_loss.1} parent=11 // pred_check_branch
        %216 = sbr.rel (%p214) target = $region28
      $region27: #{vae_loss.1} parent=11 // pred_region
        _
      $region28: #{vae_loss.1} parent=11 // pred_fallthru
        _
    $region12: #{vae_loss.1} parent=5 // pred_fallthru
      _
    %p217 = scmp.lt.s32.totalorder %s12, 2
    // Predicated region
    $region29: #{vae_loss.1} parent=5 // pred_check
      %p218 = pneg %p217
    $region30: #{vae_loss.1} parent=5 // pred_check_branch
      %220 = sbr.rel (%p218) target = $region32
    $region31: #{vae_loss.1} parent=5 // pred_region
      // Predicated region
      $region33: #{vae_loss.1} parent=31 // pred_check
        %p221 = pneg %p46
      $region34: #{vae_loss.1} parent=31 // pred_check_branch
        %223 = sbr.rel (%p221) target = $region36
      $region35: #{vae_loss.1} parent=31 // pred_region
        %s224 = sadd.s32 %s19, %s20
        %p225 = scmp.lt.s32.totalorder %s224, 1
        %s226 = scalar_select %p225, %s224, 1
        %s227 = smul.addr %s226, 8
        %s228 = scalar_lea.vmem %s0, %s227
        %s229 = sadd.s32 %s19, %s20
      $region36: #{vae_loss.1} parent=31 // pred_fallthru
        _
      // Predicated region
      $region37: #{vae_loss.1} parent=31 // pred_check
        %p230 = pneg %p74
      $region38: #{vae_loss.1} parent=31 // pred_check_branch
        %232 = sbr.rel (%p230) target = $region40
      $region39: #{vae_loss.1} parent=31 // pred_region
        %s233 = sadd.s32 %s19, %s20
        %p234 = scmp.lt.s32.totalorder %s233, 1
        %s235 = scalar_select %p234, %s233, 1
        %s236 = smul.addr %s235, 8
        %s237 = scalar_lea.vmem %s1, %s236
        %s238 = sadd.s32 %s19, %s20
      $region40: #{vae_loss.1} parent=31 // pred_fallthru
        _
    $region32: #{vae_loss.1} parent=5 // pred_fallthru
      _
    %p239 = scmp.le.s32.totalorder 1, %s12
    %p240 = scmp.lt.s32.totalorder %s12, 3
    %p241 = pnand %p239, %p240
    %p242 = pneg %p241
    // Predicated region
    $region41: #{vae_loss.1} parent=5 // pred_check
      _
    $region42: #{vae_loss.1} parent=5 // pred_check_branch
      %244 = sbr.rel (%p241) target = $region44
    $region43: #{vae_loss.1} parent=5 // pred_region
      %s245 = ssub.s32 %s12, 1
      %s246 = sadd.s32 %s21, %s22
      %p247 = scmp.lt.s32.totalorder %s246, 1
      %s248 = scalar_select %p247, %s246, 1
      %s249 = smul.addr %s248, 8
      %s250 = scalar_lea.vmem %s0, %s249
      %p251 = pneg %p52
      %p252 = pneg %p49
      %s253 = sadd.s32 %s21, %s22
      %p254 = scmp.lt.s32.totalorder %s253, 1
      %s255 = scalar_select %p254, %s253, 1
      %s256 = smul.addr %s255, 8
      %s257 = scalar_lea.vmem %s1, %s256
      %p258 = pneg %p80
      %p259 = pneg %p77
      %p260 = pneg %p101
      %p261 = pneg %p98
      %p262 = pneg %p122
      %p263 = pneg %p119
      %p264 = pneg %p143
      %p265 = pneg %p140
      %p266 = pneg %p164
      %p267 = pneg %p161
      %p268 = pneg %p190
      %p269 = pneg %p187
      %p270 = scmp.lt.s32.totalorder %s21, 1
      %s271 = scalar_select %p270, %s21, 1
      %s272 = smul.addr %s271, 8
      %s273 = scalar_lea.vmem %s6, %s272
      %s274 = sadd.s32 %s21, %s22
      %p275 = scmp.lt.s32.totalorder %s274, 1
      %s276 = scalar_select %p275, %s274, 1
      %s277 = smul.addr %s276, 8
      %s278 = scalar_lea.vmem %s0, %s277
      %s279 = sadd.s32 %s21, %s22
      %s280 = sadd.s32 %s21, %s22
      %p281 = scmp.lt.s32.totalorder %s280, 1
      %s282 = scalar_select %p281, %s280, 1
      %s283 = smul.addr %s282, 8
      %s284 = scalar_lea.vmem %s1, %s283
      %s285 = sadd.s32 %s21, %s22
      %p286 = scmp.lt.s32.totalorder %s21, 1
      %s287 = scalar_select %p286, %s21, 1
      %s288 = smul.addr %s287, 8
      %s289 = scalar_lea.vmem %s6, %s288
      %p291 = scmp.eq.s32.totalorder %s22, 0
      // Predicated region
      $region45: #{vae_loss.1} parent=43 // pred_check
        %p292 = pneg %p291
      $region46: #{vae_loss.1} parent=43 // pred_check_branch
        %294 = sbr.rel (%p292) target = $region48
      $region47: #{vae_loss.1} parent=43 // pred_region
        %295 = vst [vmem:[#allocation2] sm:$0xff] 0.0
      $region48: #{vae_loss.1} parent=43 // pred_fallthru
        _
      %v296 = vld [vmem:[%s278] sm:$0xff]
      %v297 = vld [vmem:[%s284] sm:$0xff]
      %v298 = vpack.c.bf16 %v296, %v296
      %v299 = vld [vmem:[%s2] sm:$0xf]
      %v300 = vld [vmem:[%s2 + $0x4] sm:$0xf]
      %v301 = vld [vmem:[%s2 + $0x8] sm:$0xf]
      %v302 = vld [vmem:[%s2 + $0xc] sm:$0xf]
      %v303 = vld [vmem:[%s2 + $0x10] sm:$0xf]
      %v304 = vld [vmem:[%s2 + $0x14] sm:$0xf]
      %v305 = vld [vmem:[%s2 + $0x18] sm:$0xf]
      %v306 = vld [vmem:[%s2 + $0x1c] sm:$0xf]
      %v307 = vld [vmem:[%s2 + $0x20] sm:$0xf]
      %v308 = vld [vmem:[%s2 + $0x24] sm:$0xf]
      %v309 = vld [vmem:[%s2 + $0x28] sm:$0xf]
      %v310 = vld [vmem:[%s2 + $0x2c] sm:$0xf]
      %v311 = vld [vmem:[%s2 + $0x30] sm:$0xf]
      %v312 = vld [vmem:[%s2 + $0x34] sm:$0xf]
      %v313 = vld [vmem:[%s2 + $0x38] sm:$0xf]
      %v314 = vld [vmem:[%s2 + $0x3c] sm:$0xf]
      %v331 = vunpack.c.l.b16 %v299
      %v332 = vunpack.c.l.b16 %v300
      %v333 = vunpack.c.l.b16 %v301
      %v334 = vunpack.c.l.b16 %v302
      %v335 = vunpack.c.l.b16 %v303
      %v336 = vunpack.c.l.b16 %v304
      %v337 = vunpack.c.l.b16 %v305
      %v338 = vunpack.c.l.b16 %v306
      %v339 = vunpack.c.l.b16 %v307
      %v340 = vunpack.c.l.b16 %v308
      %v341 = vunpack.c.l.b16 %v309
      %v342 = vunpack.c.l.b16 %v310
      %v343 = vunpack.c.l.b16 %v311
      %v344 = vunpack.c.l.b16 %v312
      %v345 = vunpack.c.l.b16 %v313
      %v346 = vunpack.c.l.b16 %v314
      %v347 = vpack.c.b16 %v332, %v331
      %v348 = vpack.c.b16 %v334, %v333
      %v349 = vpack.c.b16 %v336, %v335
      %v350 = vpack.c.b16 %v338, %v337
      %v351 = vpack.c.b16 %v340, %v339
      %v352 = vpack.c.b16 %v342, %v341
      %v353 = vpack.c.b16 %v344, %v343
      %v354 = vpack.c.b16 %v346, %v345
      %363 = vmatprep.subr.bf16.mxu0 0
      %364 = vmatpush1.bf16.msra.mxu0 %v347
      %365 = vmatprep.subr.bf16.mxu0 0
      %366 = vmatpush1.bf16.msra.mxu0 %v348
      %367 = vmatprep.subr.bf16.mxu0 0
      %368 = vmatpush1.bf16.msra.mxu0 %v349
      %369 = vmatprep.subr.bf16.mxu0 0
      %370 = vmatpush1.bf16.msra.mxu0 %v350
      %371 = vmatprep.subr.bf16.mxu0 0
      %372 = vmatpush1.bf16.msra.mxu0 %v351
      %373 = vmatprep.subr.bf16.mxu0 0
      %374 = vmatpush1.bf16.msra.mxu0 %v352
      %375 = vmatprep.subr.bf16.mxu0 0
      %376 = vmatpush1.bf16.msra.mxu0 %v353
      %377 = vmatprep.subr.bf16.mxu0 0
      %378 = vmatpush1.bf16.msra.mxu0 %v354
      %379 = vmatprep.subr.bf16.mxu0 0
      %380 = vmatpush1.bf16.msra.mxu0 0
      %381 = vmatprep.subr.bf16.mxu0 0
      %382 = vmatpush1.bf16.msra.mxu0 0
      %383 = vmatprep.subr.bf16.mxu0 0
      %384 = vmatpush1.bf16.msra.mxu0 0
      %385 = vmatprep.subr.bf16.mxu0 0
      %386 = vmatpush1.bf16.msra.mxu0 0
      %387 = vmatprep.subr.bf16.mxu0 0
      %388 = vmatpush1.bf16.msra.mxu0 0
      %389 = vmatprep.subr.bf16.mxu0 0
      %390 = vmatpush1.bf16.msra.mxu0 0
      %391 = vmatprep.subr.bf16.mxu0 0
      %392 = vmatpush1.bf16.msra.mxu0 0
      %393 = vmatprep.subr.bf16.mxu0 0
      %394 = vmatpush1.bf16.msra.mxu0 0
      %395 = vmatprep.mubr.bf16.mxu0 0
      %396 = vmatmul.mubr.bf16.gmra.mrb[0].mxu0 %v298
      %v397 = vpop.f32.mrb[0].mxu0
      %v398 = vadd.f32 0.0, %v397
      %v399 = vpop.f32.mrb[0].mxu0
      %v400 = vpop.f32.mrb[0].mxu0
      %v401 = vpop.f32.mrb[0].mxu0
      %402 = vdwg.mxu0
      %v403 = vmul.f32 %v297, %v398
      %v404 = vld [vmem:[%s3] sm:$0xff]
      %v405 = vld [vmem:[%s3 + $0x8] sm:$0xff]
      %v406 = vld [vmem:[%s3 + $0x10] sm:$0xff]
      %v407 = vld [vmem:[%s3 + $0x18] sm:$0xff]
      %v408 = vld [vmem:[%s3 + $0x20] sm:$0xff]
      %v409 = vld [vmem:[%s3 + $0x28] sm:$0xff]
      %v410 = vld [vmem:[%s3 + $0x30] sm:$0xff]
      %v411 = vld [vmem:[%s3 + $0x38] sm:$0xff]
      %v412 = vld [vmem:[%s3 + $0x40] sm:$0xff]
      %v413 = vld [vmem:[%s3 + $0x48] sm:$0xff]
      %v414 = vld [vmem:[%s3 + $0x50] sm:$0xff]
      %v415 = vld [vmem:[%s3 + $0x58] sm:$0xff]
      %v416 = vld [vmem:[%s3 + $0x60] sm:$0xff]
      %v417 = vld [vmem:[%s3 + $0x68] sm:$0xff]
      %v418 = vld [vmem:[%s3 + $0x70] sm:$0xff]
      %v419 = vld [vmem:[%s3 + $0x78] sm:$0xff]
      %420 = vmatprep.subr.mxu0 0.0
      %v421 = vand.u32 %v404, 4294901760
      %422 = vmatpush1.msra.mxu0 %v421
      %423 = vmatprep.subr.mxu0 0.0
      %v424 = vand.u32 %v405, 4294901760
      %425 = vmatpush1.msra.mxu0 %v424
      %426 = vmatprep.subr.mxu0 0.0
      %v427 = vand.u32 %v406, 4294901760
      %428 = vmatpush1.msra.mxu0 %v427
      %429 = vmatprep.subr.mxu0 0.0
      %v430 = vand.u32 %v407, 4294901760
      %431 = vmatpush1.msra.mxu0 %v430
      %432 = vmatprep.subr.mxu0 0.0
      %v433 = vand.u32 %v408, 4294901760
      %434 = vmatpush1.msra.mxu0 %v433
      %435 = vmatprep.subr.mxu0 0.0
      %v436 = vand.u32 %v409, 4294901760
      %437 = vmatpush1.msra.mxu0 %v436
      %438 = vmatprep.subr.mxu0 0.0
      %v439 = vand.u32 %v410, 4294901760
      %440 = vmatpush1.msra.mxu0 %v439
      %441 = vmatprep.subr.mxu0 0.0
      %v442 = vand.u32 %v411, 4294901760
      %443 = vmatpush1.msra.mxu0 %v442
      %444 = vmatprep.subr.mxu0 0.0
      %v445 = vand.u32 %v412, 4294901760
      %446 = vmatpush1.msra.mxu0 %v445
      %447 = vmatprep.subr.mxu0 0.0
      %v448 = vand.u32 %v413, 4294901760
      %449 = vmatpush1.msra.mxu0 %v448
      %450 = vmatprep.subr.mxu0 0.0
      %v451 = vand.u32 %v414, 4294901760
      %452 = vmatpush1.msra.mxu0 %v451
      %453 = vmatprep.subr.mxu0 0.0
      %v454 = vand.u32 %v415, 4294901760
      %455 = vmatpush1.msra.mxu0 %v454
      %456 = vmatprep.subr.mxu0 0.0
      %v457 = vand.u32 %v416, 4294901760
      %458 = vmatpush1.msra.mxu0 %v457
      %459 = vmatprep.subr.mxu0 0.0
      %v460 = vand.u32 %v417, 4294901760
      %461 = vmatpush1.msra.mxu0 %v460
      %462 = vmatprep.subr.mxu0 0.0
      %v463 = vand.u32 %v418, 4294901760
      %464 = vmatpush1.msra.mxu0 %v463
      %465 = vmatprep.subr.mxu0 0.0
      %v466 = vand.u32 %v419, 4294901760
      %467 = vmatpush1.msra.mxu0 %v466
      %468 = vmatprep.subr.mxu0 0.0
      %469 = vmatpush1.msra.mxu0 0.0
      %470 = vmatprep.subr.mxu0 0.0
      %471 = vmatpush1.msra.mxu0 0.0
      %472 = vmatprep.subr.mxu0 0.0
      %473 = vmatpush1.msra.mxu0 0.0
      %474 = vmatprep.subr.mxu0 0.0
      %475 = vmatpush1.msra.mxu0 0.0
      %476 = vmatprep.subr.mxu0 0.0
      %477 = vmatpush1.msra.mxu0 0.0
      %478 = vmatprep.subr.mxu0 0.0
      %479 = vmatpush1.msra.mxu0 0.0
      %480 = vmatprep.subr.mxu0 0.0
      %481 = vmatpush1.msra.mxu0 0.0
      %482 = vmatprep.subr.mxu0 0.0
      %483 = vmatpush1.msra.mxu0 0.0
      %484 = vmatprep.subr.mxu0 0.0
      %485 = vmatpush1.msra.mxu0 0.0
      %486 = vmatprep.subr.mxu0 0.0
      %487 = vmatpush1.msra.mxu0 0.0
      %488 = vmatprep.subr.mxu0 0.0
      %489 = vmatpush1.msra.mxu0 0.0
      %490 = vmatprep.subr.mxu0 0.0
      %491 = vmatpush1.msra.mxu0 0.0
      %492 = vmatprep.subr.mxu0 0.0
      %493 = vmatpush1.msra.mxu0 0.0
      %494 = vmatprep.subr.mxu0 0.0
      %495 = vmatpush1.msra.mxu0 0.0
      %496 = vmatprep.subr.mxu0 0.0
      %497 = vmatpush1.msra.mxu0 0.0
      %498 = vmatprep.subr.mxu0 0.0
      %499 = vmatpush1.msra.mxu0 0.0
      %500 = vmatprep.mubr.f32.mxu0 0.0
      %v501 = vand.u32 %v403, 4294901760
      %v502 = vsub.f32 %v403, %v501
      %v503 = vand.u32 %v502, 4294901760
      %v504 = vsub.f32 %v502, %v503
      %v505 = vand.u32 %v504, 4294901760
      %506 = vmatmul.mubr.f32.gmra.mrb[0].mxu0 %v505
      %v507 = vpop.f32.mrb[0].mxu0
      %v508 = vadd.f32 0.0, %v507
      %v509 = vpop.f32.mrb[0].mxu0
      %510 = vdwg.mxu0
      %511 = vmatprep.subr.mxu0 0.0
      %v512 = vand.u32 %v404, 4294901760
      %v513 = vsub.f32 %v404, %v512
      %v514 = vand.u32 %v513, 4294901760
      %v515 = vsub.f32 %v513, %v514
      %v516 = vand.u32 %v515, 4294901760
      %517 = vmatpush1.msra.mxu0 %v516
      %518 = vmatprep.subr.mxu0 0.0
      %v519 = vand.u32 %v405, 4294901760
      %v520 = vsub.f32 %v405, %v519
      %v521 = vand.u32 %v520, 4294901760
      %v522 = vsub.f32 %v520, %v521
      %v523 = vand.u32 %v522, 4294901760
      %524 = vmatpush1.msra.mxu0 %v523
      %525 = vmatprep.subr.mxu0 0.0
      %v526 = vand.u32 %v406, 4294901760
      %v527 = vsub.f32 %v406, %v526
      %v528 = vand.u32 %v527, 4294901760
      %v529 = vsub.f32 %v527, %v528
      %v530 = vand.u32 %v529, 4294901760
      %531 = vmatpush1.msra.mxu0 %v530
      %532 = vmatprep.subr.mxu0 0.0
      %v533 = vand.u32 %v407, 4294901760
      %v534 = vsub.f32 %v407, %v533
      %v535 = vand.u32 %v534, 4294901760
      %v536 = vsub.f32 %v534, %v535
      %v537 = vand.u32 %v536, 4294901760
      %538 = vmatpush1.msra.mxu0 %v537
      %539 = vmatprep.subr.mxu0 0.0
      %v540 = vand.u32 %v408, 4294901760
      %v541 = vsub.f32 %v408, %v540
      %v542 = vand.u32 %v541, 4294901760
      %v543 = vsub.f32 %v541, %v542
      %v544 = vand.u32 %v543, 4294901760
      %545 = vmatpush1.msra.mxu0 %v544
      %546 = vmatprep.subr.mxu0 0.0
      %v547 = vand.u32 %v409, 4294901760
      %v548 = vsub.f32 %v409, %v547
      %v549 = vand.u32 %v548, 4294901760
      %v550 = vsub.f32 %v548, %v549
      %v551 = vand.u32 %v550, 4294901760
      %552 = vmatpush1.msra.mxu0 %v551
      %553 = vmatprep.subr.mxu0 0.0
      %v554 = vand.u32 %v410, 4294901760
      %v555 = vsub.f32 %v410, %v554
      %v556 = vand.u32 %v555, 4294901760
      %v557 = vsub.f32 %v555, %v556
      %v558 = vand.u32 %v557, 4294901760
      %559 = vmatpush1.msra.mxu0 %v558
      %560 = vmatprep.subr.mxu0 0.0
      %v561 = vand.u32 %v411, 4294901760
      %v562 = vsub.f32 %v411, %v561
      %v563 = vand.u32 %v562, 4294901760
      %v564 = vsub.f32 %v562, %v563
      %v565 = vand.u32 %v564, 4294901760
      %566 = vmatpush1.msra.mxu0 %v565
      %567 = vmatprep.subr.mxu0 0.0
      %v568 = vand.u32 %v412, 4294901760
      %v569 = vsub.f32 %v412, %v568
      %v570 = vand.u32 %v569, 4294901760
      %v571 = vsub.f32 %v569, %v570
      %v572 = vand.u32 %v571, 4294901760
      %573 = vmatpush1.msra.mxu0 %v572
      %574 = vmatprep.subr.mxu0 0.0
      %v575 = vand.u32 %v413, 4294901760
      %v576 = vsub.f32 %v413, %v575
      %v577 = vand.u32 %v576, 4294901760
      %v578 = vsub.f32 %v576, %v577
      %v579 = vand.u32 %v578, 4294901760
      %580 = vmatpush1.msra.mxu0 %v579
      %581 = vmatprep.subr.mxu0 0.0
      %v582 = vand.u32 %v414, 4294901760
      %v583 = vsub.f32 %v414, %v582
      %v584 = vand.u32 %v583, 4294901760
      %v585 = vsub.f32 %v583, %v584
      %v586 = vand.u32 %v585, 4294901760
      %587 = vmatpush1.msra.mxu0 %v586
      %588 = vmatprep.subr.mxu0 0.0
      %v589 = vand.u32 %v415, 4294901760
      %v590 = vsub.f32 %v415, %v589
      %v591 = vand.u32 %v590, 4294901760
      %v592 = vsub.f32 %v590, %v591
      %v593 = vand.u32 %v592, 4294901760
      %594 = vmatpush1.msra.mxu0 %v593
      %595 = vmatprep.subr.mxu0 0.0
      %v596 = vand.u32 %v416, 4294901760
      %v597 = vsub.f32 %v416, %v596
      %v598 = vand.u32 %v597, 4294901760
      %v599 = vsub.f32 %v597, %v598
      %v600 = vand.u32 %v599, 4294901760
      %601 = vmatpush1.msra.mxu0 %v600
      %602 = vmatprep.subr.mxu0 0.0
      %v603 = vand.u32 %v417, 4294901760
      %v604 = vsub.f32 %v417, %v603
      %v605 = vand.u32 %v604, 4294901760
      %v606 = vsub.f32 %v604, %v605
      %v607 = vand.u32 %v606, 4294901760
      %608 = vmatpush1.msra.mxu0 %v607
      %609 = vmatprep.subr.mxu0 0.0
      %v610 = vand.u32 %v418, 4294901760
      %v611 = vsub.f32 %v418, %v610
      %v612 = vand.u32 %v611, 4294901760
      %v613 = vsub.f32 %v611, %v612
      %v614 = vand.u32 %v613, 4294901760
      %615 = vmatpush1.msra.mxu0 %v614
      %616 = vmatprep.subr.mxu0 0.0
      %v617 = vand.u32 %v419, 4294901760
      %v618 = vsub.f32 %v419, %v617
      %v619 = vand.u32 %v618, 4294901760
      %v620 = vsub.f32 %v618, %v619
      %v621 = vand.u32 %v620, 4294901760
      %622 = vmatpush1.msra.mxu0 %v621
      %623 = vmatprep.subr.mxu0 0.0
      %624 = vmatpush1.msra.mxu0 0.0
      %625 = vmatprep.subr.mxu0 0.0
      %626 = vmatpush1.msra.mxu0 0.0
      %627 = vmatprep.subr.mxu0 0.0
      %628 = vmatpush1.msra.mxu0 0.0
      %629 = vmatprep.subr.mxu0 0.0
      %630 = vmatpush1.msra.mxu0 0.0
      %631 = vmatprep.subr.mxu0 0.0
      %632 = vmatpush1.msra.mxu0 0.0
      %633 = vmatprep.subr.mxu0 0.0
      %634 = vmatpush1.msra.mxu0 0.0
      %635 = vmatprep.subr.mxu0 0.0
      %636 = vmatpush1.msra.mxu0 0.0
      %637 = vmatprep.subr.mxu0 0.0
      %638 = vmatpush1.msra.mxu0 0.0
      %639 = vmatprep.subr.mxu0 0.0
      %640 = vmatpush1.msra.mxu0 0.0
      %641 = vmatprep.subr.mxu0 0.0
      %642 = vmatpush1.msra.mxu0 0.0
      %643 = vmatprep.subr.mxu0 0.0
      %644 = vmatpush1.msra.mxu0 0.0
      %645 = vmatprep.subr.mxu0 0.0
      %646 = vmatpush1.msra.mxu0 0.0
      %647 = vmatprep.subr.mxu0 0.0
      %648 = vmatpush1.msra.mxu0 0.0
      %649 = vmatprep.subr.mxu0 0.0
      %650 = vmatpush1.msra.mxu0 0.0
      %651 = vmatprep.subr.mxu0 0.0
      %652 = vmatpush1.msra.mxu0 0.0
      %653 = vmatprep.subr.mxu0 0.0
      %654 = vmatpush1.msra.mxu0 0.0
      %655 = vmatprep.mubr.f32.mxu0 0.0
      %v656 = vand.u32 %v403, 4294901760
      %657 = vmatmul.mubr.f32.gmra.mrb[0].mxu0 %v656
      %v658 = vpop.f32.mrb[0].mxu0
      %v659 = vadd.f32 %v508, %v658
      %v660 = vpop.f32.mrb[0].mxu0
      %661 = vdwg.mxu0
      %662 = vmatprep.subr.mxu0 0.0
      %v663 = vand.u32 %v404, 4294901760
      %v664 = vsub.f32 %v404, %v663
      %665 = vmatpush1.msra.mxu0 %v664
      %666 = vmatprep.subr.mxu0 0.0
      %v667 = vand.u32 %v405, 4294901760
      %v668 = vsub.f32 %v405, %v667
      %669 = vmatpush1.msra.mxu0 %v668
      %670 = vmatprep.subr.mxu0 0.0
      %v671 = vand.u32 %v406, 4294901760
      %v672 = vsub.f32 %v406, %v671
      %673 = vmatpush1.msra.mxu0 %v672
      %674 = vmatprep.subr.mxu0 0.0
      %v675 = vand.u32 %v407, 4294901760
      %v676 = vsub.f32 %v407, %v675
      %677 = vmatpush1.msra.mxu0 %v676
      %678 = vmatprep.subr.mxu0 0.0
      %v679 = vand.u32 %v408, 4294901760
      %v680 = vsub.f32 %v408, %v679
      %681 = vmatpush1.msra.mxu0 %v680
      %682 = vmatprep.subr.mxu0 0.0
      %v683 = vand.u32 %v409, 4294901760
      %v684 = vsub.f32 %v409, %v683
      %685 = vmatpush1.msra.mxu0 %v684
      %686 = vmatprep.subr.mxu0 0.0
      %v687 = vand.u32 %v410, 4294901760
      %v688 = vsub.f32 %v410, %v687
      %689 = vmatpush1.msra.mxu0 %v688
      %690 = vmatprep.subr.mxu0 0.0
      %v691 = vand.u32 %v411, 4294901760
      %v692 = vsub.f32 %v411, %v691
      %693 = vmatpush1.msra.mxu0 %v692
      %694 = vmatprep.subr.mxu0 0.0
      %v695 = vand.u32 %v412, 4294901760
      %v696 = vsub.f32 %v412, %v695
      %697 = vmatpush1.msra.mxu0 %v696
      %698 = vmatprep.subr.mxu0 0.0
      %v699 = vand.u32 %v413, 4294901760
      %v700 = vsub.f32 %v413, %v699
      %701 = vmatpush1.msra.mxu0 %v700
      %702 = vmatprep.subr.mxu0 0.0
      %v703 = vand.u32 %v414, 4294901760
      %v704 = vsub.f32 %v414, %v703
      %705 = vmatpush1.msra.mxu0 %v704
      %706 = vmatprep.subr.mxu0 0.0
      %v707 = vand.u32 %v415, 4294901760
      %v708 = vsub.f32 %v415, %v707
      %709 = vmatpush1.msra.mxu0 %v708
      %710 = vmatprep.subr.mxu0 0.0
      %v711 = vand.u32 %v416, 4294901760
      %v712 = vsub.f32 %v416, %v711
      %713 = vmatpush1.msra.mxu0 %v712
      %714 = vmatprep.subr.mxu0 0.0
      %v715 = vand.u32 %v417, 4294901760
      %v716 = vsub.f32 %v417, %v715
      %717 = vmatpush1.msra.mxu0 %v716
      %718 = vmatprep.subr.mxu0 0.0
      %v719 = vand.u32 %v418, 4294901760
      %v720 = vsub.f32 %v418, %v719
      %721 = vmatpush1.msra.mxu0 %v720
      %722 = vmatprep.subr.mxu0 0.0
      %v723 = vand.u32 %v419, 4294901760
      %v724 = vsub.f32 %v419, %v723
      %725 = vmatpush1.msra.mxu0 %v724
      %726 = vmatprep.subr.mxu0 0.0
      %727 = vmatpush1.msra.mxu0 0.0
      %728 = vmatprep.subr.mxu0 0.0
      %729 = vmatpush1.msra.mxu0 0.0
      %730 = vmatprep.subr.mxu0 0.0
      %731 = vmatpush1.msra.mxu0 0.0
      %732 = vmatprep.subr.mxu0 0.0
      %733 = vmatpush1.msra.mxu0 0.0
      %734 = vmatprep.subr.mxu0 0.0
      %735 = vmatpush1.msra.mxu0 0.0
      %736 = vmatprep.subr.mxu0 0.0
      %737 = vmatpush1.msra.mxu0 0.0
      %738 = vmatprep.subr.mxu0 0.0
      %739 = vmatpush1.msra.mxu0 0.0
      %740 = vmatprep.subr.mxu0 0.0
      %741 = vmatpush1.msra.mxu0 0.0
      %742 = vmatprep.subr.mxu0 0.0
      %743 = vmatpush1.msra.mxu0 0.0
      %744 = vmatprep.subr.mxu0 0.0
      %745 = vmatpush1.msra.mxu0 0.0
      %746 = vmatprep.subr.mxu0 0.0
      %747 = vmatpush1.msra.mxu0 0.0
      %748 = vmatprep.subr.mxu0 0.0
      %749 = vmatpush1.msra.mxu0 0.0
      %750 = vmatprep.subr.mxu0 0.0
      %751 = vmatpush1.msra.mxu0 0.0
      %752 = vmatprep.subr.mxu0 0.0
      %753 = vmatpush1.msra.mxu0 0.0
      %754 = vmatprep.subr.mxu0 0.0
      %755 = vmatpush1.msra.mxu0 0.0
      %756 = vmatprep.subr.mxu0 0.0
      %757 = vmatpush1.msra.mxu0 0.0
      %758 = vmatprep.mubr.f32.mxu0 0.0
      %v759 = vand.u32 %v403, 4294901760
      %v760 = vsub.f32 %v403, %v759
      %761 = vmatmul.mubr.f32.gmra.mrb[0].mxu0 %v760
      %v762 = vpop.f32.mrb[0].mxu0
      %v763 = vadd.f32 %v659, %v762
      %v764 = vpop.f32.mrb[0].mxu0
      %765 = vdwg.mxu0
      %766 = vmatprep.subr.mxu0 0.0
      %v767 = vand.u32 %v404, 4294901760
      %768 = vmatpush1.msra.mxu0 %v767
      %769 = vmatprep.subr.mxu0 0.0
      %v770 = vand.u32 %v405, 4294901760
      %771 = vmatpush1.msra.mxu0 %v770
      %772 = vmatprep.subr.mxu0 0.0
      %v773 = vand.u32 %v406, 4294901760
      %774 = vmatpush1.msra.mxu0 %v773
      %775 = vmatprep.subr.mxu0 0.0
      %v776 = vand.u32 %v407, 4294901760
      %777 = vmatpush1.msra.mxu0 %v776
      %778 = vmatprep.subr.mxu0 0.0
      %v779 = vand.u32 %v408, 4294901760
      %780 = vmatpush1.msra.mxu0 %v779
      %781 = vmatprep.subr.mxu0 0.0
      %v782 = vand.u32 %v409, 4294901760
      %783 = vmatpush1.msra.mxu0 %v782
      %784 = vmatprep.subr.mxu0 0.0
      %v785 = vand.u32 %v410, 4294901760
      %786 = vmatpush1.msra.mxu0 %v785
      %787 = vmatprep.subr.mxu0 0.0
      %v788 = vand.u32 %v411, 4294901760
      %789 = vmatpush1.msra.mxu0 %v788
      %790 = vmatprep.subr.mxu0 0.0
      %v791 = vand.u32 %v412, 4294901760
      %792 = vmatpush1.msra.mxu0 %v791
      %793 = vmatprep.subr.mxu0 0.0
      %v794 = vand.u32 %v413, 4294901760
      %795 = vmatpush1.msra.mxu0 %v794
      %796 = vmatprep.subr.mxu0 0.0
      %v797 = vand.u32 %v414, 4294901760
      %798 = vmatpush1.msra.mxu0 %v797
      %799 = vmatprep.subr.mxu0 0.0
      %v800 = vand.u32 %v415, 4294901760
      %801 = vmatpush1.msra.mxu0 %v800
      %802 = vmatprep.subr.mxu0 0.0
      %v803 = vand.u32 %v416, 4294901760
      %804 = vmatpush1.msra.mxu0 %v803
      %805 = vmatprep.subr.mxu0 0.0
      %v806 = vand.u32 %v417, 4294901760
      %807 = vmatpush1.msra.mxu0 %v806
      %808 = vmatprep.subr.mxu0 0.0
      %v809 = vand.u32 %v418, 4294901760
      %810 = vmatpush1.msra.mxu0 %v809
      %811 = vmatprep.subr.mxu0 0.0
      %v812 = vand.u32 %v419, 4294901760
      %813 = vmatpush1.msra.mxu0 %v812
      %814 = vmatprep.subr.mxu0 0.0
      %815 = vmatpush1.msra.mxu0 0.0
      %816 = vmatprep.subr.mxu0 0.0
      %817 = vmatpush1.msra.mxu0 0.0
      %818 = vmatprep.subr.mxu0 0.0
      %819 = vmatpush1.msra.mxu0 0.0
      %820 = vmatprep.subr.mxu0 0.0
      %821 = vmatpush1.msra.mxu0 0.0
      %822 = vmatprep.subr.mxu0 0.0
      %823 = vmatpush1.msra.mxu0 0.0
      %824 = vmatprep.subr.mxu0 0.0
      %825 = vmatpush1.msra.mxu0 0.0
      %826 = vmatprep.subr.mxu0 0.0
      %827 = vmatpush1.msra.mxu0 0.0
      %828 = vmatprep.subr.mxu0 0.0
      %829 = vmatpush1.msra.mxu0 0.0
      %830 = vmatprep.subr.mxu0 0.0
      %831 = vmatpush1.msra.mxu0 0.0
      %832 = vmatprep.subr.mxu0 0.0
      %833 = vmatpush1.msra.mxu0 0.0
      %834 = vmatprep.subr.mxu0 0.0
      %835 = vmatpush1.msra.mxu0 0.0
      %836 = vmatprep.subr.mxu0 0.0
      %837 = vmatpush1.msra.mxu0 0.0
      %838 = vmatprep.subr.mxu0 0.0
      %839 = vmatpush1.msra.mxu0 0.0
      %840 = vmatprep.subr.mxu0 0.0
      %841 = vmatpush1.msra.mxu0 0.0
      %842 = vmatprep.subr.mxu0 0.0
      %843 = vmatpush1.msra.mxu0 0.0
      %844 = vmatprep.subr.mxu0 0.0
      %845 = vmatpush1.msra.mxu0 0.0
      %846 = vmatprep.mubr.f32.mxu0 0.0
      %v847 = vand.u32 %v403, 4294901760
      %v848 = vsub.f32 %v403, %v847
      %v849 = vand.u32 %v848, 4294901760
      %850 = vmatmul.mubr.f32.gmra.mrb[0].mxu0 %v849
      %v851 = vpop.f32.mrb[0].mxu0
      %v852 = vadd.f32 %v763, %v851
      %v853 = vpop.f32.mrb[0].mxu0
      %854 = vdwg.mxu0
      %855 = vmatprep.subr.mxu0 0.0
      %v856 = vand.u32 %v404, 4294901760
      %v857 = vsub.f32 %v404, %v856
      %v858 = vand.u32 %v857, 4294901760
      %859 = vmatpush1.msra.mxu0 %v858
      %860 = vmatprep.subr.mxu0 0.0
      %v861 = vand.u32 %v405, 4294901760
      %v862 = vsub.f32 %v405, %v861
      %v863 = vand.u32 %v862, 4294901760
      %864 = vmatpush1.msra.mxu0 %v863
      %865 = vmatprep.subr.mxu0 0.0
      %v866 = vand.u32 %v406, 4294901760
      %v867 = vsub.f32 %v406, %v866
      %v868 = vand.u32 %v867, 4294901760
      %869 = vmatpush1.msra.mxu0 %v868
      %870 = vmatprep.subr.mxu0 0.0
      %v871 = vand.u32 %v407, 4294901760
      %v872 = vsub.f32 %v407, %v871
      %v873 = vand.u32 %v872, 4294901760
      %874 = vmatpush1.msra.mxu0 %v873
      %875 = vmatprep.subr.mxu0 0.0
      %v876 = vand.u32 %v408, 4294901760
      %v877 = vsub.f32 %v408, %v876
      %v878 = vand.u32 %v877, 4294901760
      %879 = vmatpush1.msra.mxu0 %v878
      %880 = vmatprep.subr.mxu0 0.0
      %v881 = vand.u32 %v409, 4294901760
      %v882 = vsub.f32 %v409, %v881
      %v883 = vand.u32 %v882, 4294901760
      %884 = vmatpush1.msra.mxu0 %v883
      %885 = vmatprep.subr.mxu0 0.0
      %v886 = vand.u32 %v410, 4294901760
      %v887 = vsub.f32 %v410, %v886
      %v888 = vand.u32 %v887, 4294901760
      %889 = vmatpush1.msra.mxu0 %v888
      %890 = vmatprep.subr.mxu0 0.0
      %v891 = vand.u32 %v411, 4294901760
      %v892 = vsub.f32 %v411, %v891
      %v893 = vand.u32 %v892, 4294901760
      %894 = vmatpush1.msra.mxu0 %v893
      %895 = vmatprep.subr.mxu0 0.0
      %v896 = vand.u32 %v412, 4294901760
      %v897 = vsub.f32 %v412, %v896
      %v898 = vand.u32 %v897, 4294901760
      %899 = vmatpush1.msra.mxu0 %v898
      %900 = vmatprep.subr.mxu0 0.0
      %v901 = vand.u32 %v413, 4294901760
      %v902 = vsub.f32 %v413, %v901
      %v903 = vand.u32 %v902, 4294901760
      %904 = vmatpush1.msra.mxu0 %v903
      %905 = vmatprep.subr.mxu0 0.0
      %v906 = vand.u32 %v414, 4294901760
      %v907 = vsub.f32 %v414, %v906
      %v908 = vand.u32 %v907, 4294901760
      %909 = vmatpush1.msra.mxu0 %v908
      %910 = vmatprep.subr.mxu0 0.0
      %v911 = vand.u32 %v415, 4294901760
      %v912 = vsub.f32 %v415, %v911
      %v913 = vand.u32 %v912, 4294901760
      %914 = vmatpush1.msra.mxu0 %v913
      %915 = vmatprep.subr.mxu0 0.0
      %v916 = vand.u32 %v416, 4294901760
      %v917 = vsub.f32 %v416, %v916
      %v918 = vand.u32 %v917, 4294901760
      %919 = vmatpush1.msra.mxu0 %v918
      %920 = vmatprep.subr.mxu0 0.0
      %v921 = vand.u32 %v417, 4294901760
      %v922 = vsub.f32 %v417, %v921
      %v923 = vand.u32 %v922, 4294901760
      %924 = vmatpush1.msra.mxu0 %v923
      %925 = vmatprep.subr.mxu0 0.0
      %v926 = vand.u32 %v418, 4294901760
      %v927 = vsub.f32 %v418, %v926
      %v928 = vand.u32 %v927, 4294901760
      %929 = vmatpush1.msra.mxu0 %v928
      %930 = vmatprep.subr.mxu0 0.0
      %v931 = vand.u32 %v419, 4294901760
      %v932 = vsub.f32 %v419, %v931
      %v933 = vand.u32 %v932, 4294901760
      %934 = vmatpush1.msra.mxu0 %v933
      %935 = vmatprep.subr.mxu0 0.0
      %936 = vmatpush1.msra.mxu0 0.0
      %937 = vmatprep.subr.mxu0 0.0
      %938 = vmatpush1.msra.mxu0 0.0
      %939 = vmatprep.subr.mxu0 0.0
      %940 = vmatpush1.msra.mxu0 0.0
      %941 = vmatprep.subr.mxu0 0.0
      %942 = vmatpush1.msra.mxu0 0.0
      %943 = vmatprep.subr.mxu0 0.0
      %944 = vmatpush1.msra.mxu0 0.0
      %945 = vmatprep.subr.mxu0 0.0
      %946 = vmatpush1.msra.mxu0 0.0
      %947 = vmatprep.subr.mxu0 0.0
      %948 = vmatpush1.msra.mxu0 0.0
      %949 = vmatprep.subr.mxu0 0.0
      %950 = vmatpush1.msra.mxu0 0.0
      %951 = vmatprep.subr.mxu0 0.0
      %952 = vmatpush1.msra.mxu0 0.0
      %953 = vmatprep.subr.mxu0 0.0
      %954 = vmatpush1.msra.mxu0 0.0
      %955 = vmatprep.subr.mxu0 0.0
      %956 = vmatpush1.msra.mxu0 0.0
      %957 = vmatprep.subr.mxu0 0.0
      %958 = vmatpush1.msra.mxu0 0.0
      %959 = vmatprep.subr.mxu0 0.0
      %960 = vmatpush1.msra.mxu0 0.0
      %961 = vmatprep.subr.mxu0 0.0
      %962 = vmatpush1.msra.mxu0 0.0
      %963 = vmatprep.subr.mxu0 0.0
      %964 = vmatpush1.msra.mxu0 0.0
      %965 = vmatprep.subr.mxu0 0.0
      %966 = vmatpush1.msra.mxu0 0.0
      %967 = vmatprep.mubr.f32.mxu0 0.0
      %v968 = vand.u32 %v403, 4294901760
      %969 = vmatmul.mubr.f32.gmra.mrb[0].mxu0 %v968
      %v970 = vpop.f32.mrb[0].mxu0
      %v971 = vadd.f32 %v852, %v970
      %v972 = vpop.f32.mrb[0].mxu0
      %973 = vdwg.mxu0
      %974 = vmatprep.subr.mxu0 0.0
      %v975 = vand.u32 %v404, 4294901760
      %976 = vmatpush1.msra.mxu0 %v975
      %977 = vmatprep.subr.mxu0 0.0
      %v978 = vand.u32 %v405, 4294901760
      %979 = vmatpush1.msra.mxu0 %v978
      %980 = vmatprep.subr.mxu0 0.0
      %v981 = vand.u32 %v406, 4294901760
      %982 = vmatpush1.msra.mxu0 %v981
      %983 = vmatprep.subr.mxu0 0.0
      %v984 = vand.u32 %v407, 4294901760
      %985 = vmatpush1.msra.mxu0 %v984
      %986 = vmatprep.subr.mxu0 0.0
      %v987 = vand.u32 %v408, 4294901760
      %988 = vmatpush1.msra.mxu0 %v987
      %989 = vmatprep.subr.mxu0 0.0
      %v990 = vand.u32 %v409, 4294901760
      %991 = vmatpush1.msra.mxu0 %v990
      %992 = vmatprep.subr.mxu0 0.0
      %v993 = vand.u32 %v410, 4294901760
      %994 = vmatpush1.msra.mxu0 %v993
      %995 = vmatprep.subr.mxu0 0.0
      %v996 = vand.u32 %v411, 4294901760
      %997 = vmatpush1.msra.mxu0 %v996
      %998 = vmatprep.subr.mxu0 0.0
      %v999 = vand.u32 %v412, 4294901760
      %1000 = vmatpush1.msra.mxu0 %v999
      %1001 = vmatprep.subr.mxu0 0.0
      %v1002 = vand.u32 %v413, 4294901760
      %1003 = vmatpush1.msra.mxu0 %v1002
      %1004 = vmatprep.subr.mxu0 0.0
      %v1005 = vand.u32 %v414, 4294901760
      %1006 = vmatpush1.msra.mxu0 %v1005
      %1007 = vmatprep.subr.mxu0 0.0
      %v1008 = vand.u32 %v415, 4294901760
      %1009 = vmatpush1.msra.mxu0 %v1008
      %1010 = vmatprep.subr.mxu0 0.0
      %v1011 = vand.u32 %v416, 4294901760
      %1012 = vmatpush1.msra.mxu0 %v1011
      %1013 = vmatprep.subr.mxu0 0.0
      %v1014 = vand.u32 %v417, 4294901760
      %1015 = vmatpush1.msra.mxu0 %v1014
      %1016 = vmatprep.subr.mxu0 0.0
      %v1017 = vand.u32 %v418, 4294901760
      %1018 = vmatpush1.msra.mxu0 %v1017
      %1019 = vmatprep.subr.mxu0 0.0
      %v1020 = vand.u32 %v419, 4294901760
      %1021 = vmatpush1.msra.mxu0 %v1020
      %1022 = vmatprep.subr.mxu0 0.0
      %1023 = vmatpush1.msra.mxu0 0.0
      %1024 = vmatprep.subr.mxu0 0.0
      %1025 = vmatpush1.msra.mxu0 0.0
      %1026 = vmatprep.subr.mxu0 0.0
      %1027 = vmatpush1.msra.mxu0 0.0
      %1028 = vmatprep.subr.mxu0 0.0
      %1029 = vmatpush1.msra.mxu0 0.0
      %1030 = vmatprep.subr.mxu0 0.0
      %1031 = vmatpush1.msra.mxu0 0.0
      %1032 = vmatprep.subr.mxu0 0.0
      %1033 = vmatpush1.msra.mxu0 0.0
      %1034 = vmatprep.subr.mxu0 0.0
      %1035 = vmatpush1.msra.mxu0 0.0
      %1036 = vmatprep.subr.mxu0 0.0
      %1037 = vmatpush1.msra.mxu0 0.0
      %1038 = vmatprep.subr.mxu0 0.0
      %1039 = vmatpush1.msra.mxu0 0.0
      %1040 = vmatprep.subr.mxu0 0.0
      %1041 = vmatpush1.msra.mxu0 0.0
      %1042 = vmatprep.subr.mxu0 0.0
      %1043 = vmatpush1.msra.mxu0 0.0
      %1044 = vmatprep.subr.mxu0 0.0
      %1045 = vmatpush1.msra.mxu0 0.0
      %1046 = vmatprep.subr.mxu0 0.0
      %1047 = vmatpush1.msra.mxu0 0.0
      %1048 = vmatprep.subr.mxu0 0.0
      %1049 = vmatpush1.msra.mxu0 0.0
      %1050 = vmatprep.subr.mxu0 0.0
      %1051 = vmatpush1.msra.mxu0 0.0
      %1052 = vmatprep.subr.mxu0 0.0
      %1053 = vmatpush1.msra.mxu0 0.0
      %1054 = vmatprep.mubr.f32.mxu0 0.0
      %v1055 = vand.u32 %v403, 4294901760
      %1056 = vmatmul.mubr.f32.gmra.mrb[0].mxu0 %v1055
      %v1057 = vpop.f32.mrb[0].mxu0
      %v1058 = vadd.f32 %v971, %v1057
      %v1059 = vpop.f32.mrb[0].mxu0
      %1060 = vdwg.mxu0
      %vm1061 = vcmp.gt.f32.partialorder %v1058, 0.0
      %v1062 = vsel %vm1061, %v1058, 1.0
      %v1063 = vrcp.pop %v1062
      %v1064 = vmul.f32 %v403, %v1063
      %v1065 = vlog2.pop %v1064
      %v1066 = vmul.f32 %v1065, 0.6931472
      %v1067 = vmax.f32 %v1066, -100.0
      %v1068 = vsub.f32 1.0, %v1064
      %v1069 = vlog2.pop %v1068
      %v1070 = vmul.f32 %v1069, 0.6931472
      %v1071 = vmax.f32 %v1070, -100.0
      %v1072 = vmul.f32 %v296, %v1067
      %v1073 = vsub.f32 1.0, %v296
      %v1074 = vmul.f32 %v1073, %v1071
      %v1075 = vadd.f32 %v1072, %v1074
      %v1076 = vsub.f32 0.0, %v1075
      %v1077 = vld [vmem:[#allocation2] sm:$0xff]
      %v1078 = vadd.f32 %v1076, 0.0
      %v1079 = vadd.f32 %v1077, %v1078
      %1080 = vst [vmem:[#allocation2] sm:$0xff] %v1079
      %p1081 = scmp.eq.s32.totalorder %s21, 0
      %p1082 = pnand %p291, %p1081
      %p1083 = pneg %p1082
      // Predicated region
      $region49: #{vae_loss.1} parent=43 // pred_check
        _
      $region50: #{vae_loss.1} parent=43 // pred_check_branch
        %1085 = sbr.rel (%p1082) target = $region52
      $region51: #{vae_loss.1} parent=43 // pred_region
        %v1086 = vld [vmem:[%s4] sm:$0x3]
        %v1087 = vld [vmem:[%s5] sm:$0x3]
        %v1088 = vadd.f32 %v1087, 1.0
        %v1089 = vmul.f32 %v1086, %v1086
        %v1090 = vsub.f32 %v1088, %v1089
        %v1091 = vmul.f32 %v1087, 1.442695
        %v1092 = vpow.pop %v1091
        %v1093 = vsub.f32 %v1090, %v1092
        %vm1094 = vcmask 58368
        %v1095 = vsel %vm1094, %v1093, 0.0
        %1096 = vadd.xlane.f32.xlu0 %v1095
        %v1097 = vpop.xlane.xlu0 %1096
        %v1098 = vrot.slane %v1097, 4
        %v1099 = vadd.f32 %v1097, %v1098
        %v1100 = vrot.slane %v1099, 2
        %v1101 = vadd.f32 %v1099, %v1100
        %v1102 = vrot.slane %v1101, 1
        %v1103 = vadd.f32 %v1101, %v1102
        %s1104 = vtos %v1103
        %s1105 = smul.f32 %s1104, -0.5
        %v1106 = vlaneseq
        %v1107 = vshrl.u32 %v1106, 7
        %v1108 = vlaneseq
        %v1109 = vand.u32 %v1108, 127
        %v1110 = vld [vmem:[#allocation2] sm:$0xff]
        %vm1111 = vcmp.eq.s32.totalorder %v1107, 0
        %vm1112 = vcmp.eq.s32.totalorder %v1109, 0
        %vm1113 = vmand %vm1111, %vm1112
        %v1114 = vstv %s1105
        %v1115 = vsel %vm1113, %v1114, 0.0
        %v1116 = vadd.f32 %v1110, %v1115
        %1117 = vst [vmem:[#allocation2] sm:$0xff] %v1116
      $region52: #{vae_loss.1} parent=43 // pred_fallthru
        _
      // Predicated region
      $region53: #{vae_loss.1} parent=43 // pred_check
        %p1118 = pneg %p291
      $region54: #{vae_loss.1} parent=43 // pred_check_branch
        %1120 = sbr.rel (%p1118) target = $region56
      $region55: #{vae_loss.1} parent=43 // pred_region
        %v1121 = vld [vmem:[#allocation2] sm:$0xff]
        %1122 = vst [vmem:[%s289] sm:$0xff] %v1121
      $region56: #{vae_loss.1} parent=43 // pred_fallthru
        _
      %p1123 = scmp.lt.s32.totalorder %s21, 1
      %s1124 = scalar_select %p1123, %s21, 1
      %s1125 = smul.addr %s1124, 8
      %s1126 = scalar_lea.vmem %s6, %s1125
      // Predicated region
      $region57: #{vae_loss.1} parent=43 // pred_check
        %p1127 = pneg %p187
      $region58: #{vae_loss.1} parent=43 // pred_check_branch
        %1129 = sbr.rel (%p1127) target = $region60
      $region59: #{vae_loss.1} parent=43 // pred_region
        _
      $region60: #{vae_loss.1} parent=43 // pred_fallthru
        _
    $region44: #{vae_loss.1} parent=5 // pred_fallthru
      _
    %p1130 = scmp.le.s32.totalorder 2, %s12
    // Predicated region
    $region61: #{vae_loss.1} parent=5 // pred_check
      %p1131 = pneg %p1130
    $region62: #{vae_loss.1} parent=5 // pred_check_branch
      %1133 = sbr.rel (%p1131) target = $region64
    $region63: #{vae_loss.1} parent=5 // pred_region
      %s1134 = ssub.s32 %s12, 2
      // Predicated region
      $region65: #{vae_loss.1} parent=63 // pred_check
        %p1135 = pneg %p193
      $region66: #{vae_loss.1} parent=63 // pred_check_branch
        %1137 = sbr.rel (%p1135) target = $region68
      $region67: #{vae_loss.1} parent=63 // pred_region
        %p1138 = scmp.lt.s32.totalorder %s23, 1
        %s1139 = scalar_select %p1138, %s23, 1
        %s1140 = smul.addr %s1139, 8
        %s1141 = scalar_lea.vmem %s6, %s1140
      $region68: #{vae_loss.1} parent=63 // pred_fallthru
        _
    $region64: #{vae_loss.1} parent=5 // pred_fallthru
      _
  $region6: #{vae_loss.1} parent=0 // loop_footer
    %s16 = sadd.s32 1, %s12
  $region7: #{vae_loss.1} parent=0 // loop_footer_branch
    %11 = sbr.rel target = $region3
  $region8: #{vae_loss.1} parent=0 // loop_exit
    _

</llo_original>
